<compile_context>
chip_gen: v6e
topology: v6e:2x2x1
jax: 0.10.0
libtpu: 0.0.40
codegen_flags: <defaults>
</compile_context>

<pallas_src>
import jax
import jax.numpy as jnp
from jax import lax
from jax.experimental import pallas as pl
from jax.experimental.pallas import tpu as pltpu


_TILE_M = 256  # batch tile for the gridded path; x tile = 256*dims*4B per buffer


def _logits_tile(x_ref, w_ref, b_ref):
    """(tile_m, dims) @ (dims, 2) + bias, accumulated in f32 on the MXU."""
    acc = jnp.dot(x_ref[...], w_ref[...], preferred_element_type=jnp.float32)
    # Bias comes from SMEM as two scalars (out_features == 2); broadcast it onto
    # the tile with an iota/select instead of a separate (1,2) VMEM DMA.
    col = lax.broadcasted_iota(jnp.int32, acc.shape, dimension=1)
    bias = jnp.where(col == 0, b_ref[0], b_ref[1])
    return acc + bias


def linear_fwd_kernel(x_ref, w_ref, b_ref, o_ref):
    o_ref[...] = _logits_tile(x_ref, w_ref, b_ref).astype(o_ref.dtype)


def linear_predict_kernel(x_ref, w_ref, b_ref, o_ref):
    logits = _logits_tile(x_ref, w_ref, b_ref)
    # 2-class argmax with first-max tie-breaking (matches torch.argmax / jnp.argmax):
    # index 1 only if logits[:,1] is strictly greater than logits[:,0].
    o_ref[...] = (logits[:, 1:2] > logits[:, 0:1]).astype(jnp.int32)


def _pallas_linear(kernel, out_dtype, out_cols, x, w_t, b, tile_m=_TILE_M):
    batch, dims = x.shape
    out_features = w_t.shape[1]
    assert out_features == 2, "LinearNet has exactly 2 output classes"
    assert b.shape == (out_features,)

    if batch <= tile_m:
        # Toy / single-tile path: no grid, no index_maps, everything resident in
        # VMEM (bias in SMEM). This removes all grid-loop bookkeeping — at this
        # size the kernel is pure launch overhead anyway.
        return pl.pallas_call(
            kernel,
            out_shape=jax.ShapeDtypeStruct((batch, out_cols), out_dtype),
            in_specs=[
                pl.BlockSpec(memory_space=pltpu.MemorySpace.VMEM),   # x
                pl.BlockSpec(memory_space=pltpu.MemorySpace.VMEM),   # w_t
                pl.BlockSpec(memory_space=pltpu.MemorySpace.SMEM),   # b
            ],
            out_specs=pl.BlockSpec(memory_space=pltpu.MemorySpace.VMEM),
        )(x, w_t, b)

    # Batched path: tile the batch axis, keep W resident, mark the axis
    # "parallel" so both TensorCores are used on v7x. BlockSpec double-buffers
    # the x tiles, overlapping HBM->VMEM DMA with the matmul.
    grid = (pl.cdiv(batch, tile_m),)
    return pl.pallas_call(
        kernel,
        out_shape=jax.ShapeDtypeStruct((batch, out_cols), out_dtype),
        grid=grid,
        in_specs=[
            pl.BlockSpec((tile_m, dims), lambda i: (i, 0)),            # x tiles
            pl.BlockSpec((dims, out_features), lambda i: (0, 0)),      # W resident
            pl.BlockSpec(memory_space=pltpu.MemorySpace.SMEM),         # bias
        ],
        out_specs=pl.BlockSpec((tile_m, out_cols), lambda i: (i, 0)),
        compiler_params=pltpu.CompilerParams(
            dimension_semantics=("parallel",),
        ),
    )(x, w_t, b)


def linear_net_forward(x, w_t, b):
    """y = x @ w_t + b   (equivalent to PyTorch fc1(x) with w_t = fc1.weight.T)."""
    return _pallas_linear(linear_fwd_kernel, x.dtype, w_t.shape[1], x, w_t, b)


def linear_net_predict(x, w_t, b):
    """Mirrors LinearNet.predict: argmax over class logits (dim=1), fused in-kernel."""
    preds_2d = _pallas_linear(linear_predict_kernel, jnp.int32, 1, x, w_t, b)
    return preds_2d[:, 0]


if __name__ == "__main__":
    # Small shapes consistent with the module: dimensions=32, batch=8, 2 classes.
    dimensions = 32
    batch = 8
    out_features = 2

    key = jax.random.PRNGKey(0)
    k_x, k_w, k_b, k_x2 = jax.random.split(key, 4)

    # Deterministic parameter init (mimics PyTorch Linear default:
    # uniform(-1/sqrt(dimensions), 1/sqrt(dimensions))).
    bound = 1.0 / jnp.sqrt(jnp.float32(dimensions))
    w = jax.random.uniform(k_w, (out_features, dimensions), jnp.float32, -bound, bound)
    b = jax.random.uniform(k_b, (out_features,), jnp.float32, -bound, bound)

    x = jax.random.normal(k_x, (batch, dimensions), jnp.float32)
    w_t = w.T  # (dimensions, 2): kernel computes x @ W^T + b as x @ w_t + b

    # --- small (gridless) path ---
    y = linear_net_forward(x, w_t, b)
    jax.block_until_ready(y)
    y_ref = x @ w_t + b[None, :]
    assert y.shape == (batch, out_features)
    assert jnp.allclose(y, y_ref, atol=1e-5, rtol=1e-5)

    preds = linear_net_predict(x, w_t, b)
    jax.block_until_ready(preds)
    assert preds.shape == (batch,)
    assert jnp.array_equal(preds, jnp.argmax(y_ref, axis=1))

    # --- tiled ("parallel" grid) path at a larger batch ---
    big_batch = 512
    xb = jax.random.normal(k_x2, (big_batch, dimensions), jnp.float32)
    yb = linear_net_forward(xb, w_t, b)
    pb = linear_net_predict(xb, w_t, b)
    jax.block_until_ready((yb, pb))
    yb_ref = xb @ w_t + b[None, :]
    assert yb.shape == (big_batch, out_features)
    assert jnp.allclose(yb, yb_ref, atol=1e-5, rtol=1e-5)
    assert jnp.array_equal(pb, jnp.argmax(yb_ref, axis=1))

    print("KERNEL_OK")
</pallas_src>

<mosaic_0001>
module attributes {stable_mosaic.version = 11 : i64} {
  func.func @linear_fwd_kernel(%arg0: memref<8x32xf32, #tpu.memory_space<vmem>>, %arg1: memref<32x2xf32, #tpu.memory_space<vmem>>, %arg2: memref<2xf32, #tpu.memory_space<smem>>, %arg3: memref<8x2xf32, #tpu.memory_space<vmem>>) attributes {dimension_semantics = [], scalar_prefetch = 0 : i64, scratch_operands = 0 : i64, tpu.core_type = #tpu.core_type<tc>} {
    %c0 = arith.constant 0 : index
    %c0_0 = arith.constant 0 : index
    %0 = vector.load %arg0[%c0, %c0_0] : memref<8x32xf32, #tpu.memory_space<vmem>>, vector<8x32xf32>
    %c0_1 = arith.constant 0 : index
    %c0_2 = arith.constant 0 : index
    %1 = vector.load %arg1[%c0_1, %c0_2] : memref<32x2xf32, #tpu.memory_space<vmem>>, vector<32x2xf32>
    %cst = arith.constant dense<0.000000e+00> : vector<8x2xf32>
    %2 = tpu.matmul %0, %1, %cst {dimension_numbers = #tpu.dot_dimension_numbers<[1], [0], [0], [1], [0, 0, 1, 1], [], []>} : vector<8x32xf32>, vector<32x2xf32>, vector<8x2xf32> -> vector<8x2xf32>
    %3 = tpu.iota {dimensions = array<i32: 1>} : vector<8x2xi32>
    %c0_i32 = arith.constant 0 : i32
    %4 = vector.broadcast %c0_i32 : i32 to vector<8x2xi32>
    %5 = arith.cmpi eq, %3, %4 : vector<8x2xi32>
    %c0_3 = arith.constant 0 : index
    %6 = memref.load %arg2[%c0_3] : memref<2xf32, #tpu.memory_space<smem>>
    %c1 = arith.constant 1 : index
    %7 = memref.load %arg2[%c1] : memref<2xf32, #tpu.memory_space<smem>>
    %8 = vector.broadcast %6 : f32 to vector<8x2xf32>
    %9 = vector.broadcast %7 : f32 to vector<8x2xf32>
    %10 = arith.select %5, %8, %9 : vector<8x2xi1>, vector<8x2xf32>
    %11 = arith.addf %2, %10 : vector<8x2xf32>
    %c0_4 = arith.constant 0 : index
    %c0_5 = arith.constant 0 : index
    %12 = vector.load %arg3[%c0_4, %c0_5] : memref<8x2xf32, #tpu.memory_space<vmem>>, vector<8x2xf32>
    tpu.vector_store %arg3[%c0_4, %c0_5], %11 {strides = array<i32>} : memref<8x2xf32, #tpu.memory_space<vmem>>, vector<8x2xf32>,
    return
  }
}

</mosaic_0001>

<llo_original>
// kernel: tpu_custom_call.1
$region0: #{tpu_custom_call.1}
  #allocation0 [shape = 'u32[]', space=smem, size = 0x4, offset = 0x4, fixed_abs, tag = 'smem constant byte address 0x4 - core index']
  #allocation1 [shape = 'u32[144,128]{1,0:T(1,128)}', space=vmem, size = 0x12000, scoped, tag = 'internal scratch']
  %s0 = inlined_call_operand.vmem [shape: f32[8,32], index: 0, kind: input, shape index: {}]
  %s1 = inlined_call_operand.vmem [shape: f32[32,2], index: 1, kind: input, shape index: {}]
  %s2 = inlined_call_operand.vmem [shape: f32[2], index: 2, kind: input, shape index: {}]
  %s3 = inlined_call_operand.vmem [shape: f32[8,2], index: 3, kind: output, shape index: {}]
  %s4 = sld [smem:[#allocation0]]
  $region26: #{tpu_custom_call.1} parent=0
    _
  %s6 = ssub.s32 1, %s4
  %s7 = scalar_select 0, %s6, %s4
  $region1: #{tpu_custom_call.1} parent=0
    #allocation2 [shape = 'u8[512]{0}', space=smem, size = 0x200, scoped, tag = 'input window, operand 2, single buffered']
    #allocation3 [shape = 's32[1]{0}', space=sflag, size = 0x4, scoped, tag = 'scoped memory for tpu_custom_call.1']
    %8 = vsyncpa [#allocation3], 0
    // Predicated region
    $region2: #{tpu_custom_call.1} parent=1 // pred_check
      _
    $region3: #{tpu_custom_call.1} parent=1 // pred_check_branch
      %10 = sbr.rel (0) target = $region5
    $region4: #{tpu_custom_call.1} parent=1 // pred_region
      _
    $region5: #{tpu_custom_call.1} parent=1 // pred_fallthru
      _
    // Predicated region
    $region6: #{tpu_custom_call.1} parent=1 // pred_check
      _
    $region7: #{tpu_custom_call.1} parent=1 // pred_check_branch
      %12 = sbr.rel (0) target = $region9
    $region8: #{tpu_custom_call.1} parent=1 // pred_region
      _
    $region9: #{tpu_custom_call.1} parent=1 // pred_fallthru
      _
    // Predicated region
    $region10: #{tpu_custom_call.1} parent=1 // pred_check
      _
    $region11: #{tpu_custom_call.1} parent=1 // pred_check_branch
      %14 = sbr.rel (0) target = $region13
    $region12: #{tpu_custom_call.1} parent=1 // pred_region
      %s16 = ssub.s32 16, 16
      %17 = vsyncadd [#allocation3], %s16
      %s19 = sshll.u32 %s2, 4
      %s20 = int_to_ptr.vmem [resolvable:$true] %s19
      %22 = dma.vmem_to_smem %s20, 16, [#allocation2], [#allocation3]
    $region13: #{tpu_custom_call.1} parent=1 // pred_fallthru
      _
    // Predicated region
    $region14: #{tpu_custom_call.1} parent=1 // pred_check
      _
    $region15: #{tpu_custom_call.1} parent=1 // pred_check_branch
      %24 = sbr.rel (0) target = $region17
    $region16: #{tpu_custom_call.1} parent=1 // pred_region
      %25 = dma.done [#allocation3], 16
    $region17: #{tpu_custom_call.1} parent=1 // pred_fallthru
      _
    %26 = sfence
    %v27 = vld [vmem:[%s0] sm:$0xff]
    %v28 = vld [vmem:[%s1] sm:$0xff]
    %v29 = vld [vmem:[%s1 + $0x8] sm:$0xff]
    %v30 = vld [vmem:[%s1 + $0x10] sm:$0xff]
    %v31 = vld [vmem:[%s1 + $0x18] sm:$0xff]
    %v32 = vlaneseq
    %v33 = vand.u32 %v32, 127
    %vm34 = vcmp.eq.s32.totalorder %v33, 0
    %s35 = sld [smem:[#allocation2]]
    %s36 = sld [smem:[#allocation2 + $0x1]]
    %v37 = vstv %s35
    %v38 = vstv %s36
    %v39 = vsel %vm34, %v37, %v38
    %vm40 = vcmask 261120
    %v42 = vsel %vm40, %v27, 0
    %44 = vmatprep.subr.mxu0 0.0
    %45 = vmatpush1.msra.mxu0 0.0
    %46 = vmatprep.subr.mxu0 0.0
    %47 = vmatpush1.msra.mxu0 0.0
    %48 = vmatprep.subr.mxu0 0.0
    %49 = vmatpush1.msra.mxu0 0.0
    %50 = vmatprep.subr.mxu0 0.0
    %51 = vmatpush1.msra.mxu0 0.0
    %52 = vmatprep.subr.mxu0 0.0
    %53 = vmatpush1.msra.mxu0 0.0
    %54 = vmatprep.subr.mxu0 0.0
    %55 = vmatpush1.msra.mxu0 0.0
    %56 = vmatprep.subr.mxu0 0.0
    %57 = vmatpush1.msra.mxu0 0.0
    %58 = vmatprep.subr.mxu0 0.0
    %59 = vmatpush1.msra.mxu0 0.0
    %60 = vmatprep.subr.mxu0 0.0
    %61 = vmatpush1.msra.mxu0 0.0
    %62 = vmatprep.subr.mxu0 0.0
    %63 = vmatpush1.msra.mxu0 0.0
    %64 = vmatprep.subr.mxu0 0.0
    %65 = vmatpush1.msra.mxu0 0.0
    %66 = vmatprep.subr.mxu0 0.0
    %67 = vmatpush1.msra.mxu0 0.0
    %68 = vmatprep.subr.mxu0 0.0
    %69 = vmatpush1.msra.mxu0 %v31
    %70 = vmatprep.subr.mxu0 0.0
    %71 = vmatpush1.msra.mxu0 %v30
    %72 = vmatprep.subr.mxu0 0.0
    %73 = vmatpush1.msra.mxu0 %v29
    %74 = vmatprep.subr.mxu0 0.0
    %75 = vmatpush1.msra.mxu0 %v28
    %76 = vmatprep.subr.mxu0 0.0
    %77 = vmatpush2.msra.mxu0 0.0
    %78 = vmatprep.subr.mxu0 0.0
    %79 = vmatpush2.msra.mxu0 0.0
    %80 = vmatprep.subr.mxu0 0.0
    %81 = vmatpush2.msra.mxu0 0.0
    %82 = vmatprep.subr.mxu0 0.0
    %83 = vmatpush2.msra.mxu0 0.0
    %84 = vmatprep.subr.mxu0 0.0
    %85 = vmatpush2.msra.mxu0 0.0
    %86 = vmatprep.subr.mxu0 0.0
    %87 = vmatpush2.msra.mxu0 0.0
    %88 = vmatprep.subr.mxu0 0.0
    %89 = vmatpush2.msra.mxu0 0.0
    %90 = vmatprep.subr.mxu0 0.0
    %91 = vmatpush2.msra.mxu0 0.0
    %92 = vmatprep.subr.mxu0 0.0
    %93 = vmatpush2.msra.mxu0 0.0
    %94 = vmatprep.subr.mxu0 0.0
    %95 = vmatpush2.msra.mxu0 0.0
    %96 = vmatprep.subr.mxu0 0.0
    %97 = vmatpush2.msra.mxu0 0.0
    %98 = vmatprep.subr.mxu0 0.0
    %99 = vmatpush2.msra.mxu0 0.0
    %100 = vmatprep.subr.mxu0 0.0
    %101 = vmatpush2.msra.mxu0 0.0
    %102 = vmatprep.subr.mxu0 0.0
    %103 = vmatpush2.msra.mxu0 0.0
    %104 = vmatprep.subr.mxu0 0.0
    %105 = vmatpush2.msra.mxu0 0.0
    %106 = vmatprep.subr.mxu0 0.0
    %107 = vmatpush2.msra.mxu0 0.0
    %108 = vmatprep.mubr.f32.mxu0 0.0
    %109 = vmatmul.mubr.f32.gmra.mxu0 %v42
    %v110 = vpop.f32.mrf.mxu0
    %v111 = vadd.f32 %v39, %v110
    %v112 = vpop.f32.mrf.mxu0
    %113 = vdwg.mxu0
    %vm114 = vcmask 15360
    %115 = vst.msk [vmem:[%s3] sm:$0xff] %vm114, %v111
    // Predicated region
    $region18: #{tpu_custom_call.1} parent=1 // pred_check
      _
    $region19: #{tpu_custom_call.1} parent=1 // pred_check_branch
      %117 = sbr.rel (0) target = $region21
    $region20: #{tpu_custom_call.1} parent=1 // pred_region
      _
    $region21: #{tpu_custom_call.1} parent=1 // pred_fallthru
      _
    // Predicated region
    $region22: #{tpu_custom_call.1} parent=1 // pred_check
      _
    $region23: #{tpu_custom_call.1} parent=1 // pred_check_branch
      %119 = sbr.rel (0) target = $region25
    $region24: #{tpu_custom_call.1} parent=1 // pred_region
      _
    $region25: #{tpu_custom_call.1} parent=1 // pred_fallthru
      _
    %120 = vsyncpa [#allocation3], 1

</llo_original>
